<compile_context>
chip_gen: v5e
topology: v5e:2x2
jax: 0.10.0
libtpu: 0.0.40
codegen_flags: <defaults>
</compile_context>

<pallas_src>
import functools
import math

import jax
import jax.numpy as jnp
from jax import lax
from jax.experimental import pallas as pl
from jax.experimental.pallas import tpu as pltpu


def _xlif_kernel(HID, slab_ref, w_ref, v_ref, z_ref, pt_ref, par_ref,
                 v_out_ref, z_out_ref, pt_out_ref):
    """One batch element per grid step; everything lane-dense (last dim = H*W)."""
    # Fused conv(ff) + conv(rec) + avg-pool as a single MXU matmul:
    #   (2*HID, KCP) @ (KCP, H*W) -> (2*HID, H*W)
    out = jnp.dot(w_ref[...], slab_ref[0],
                  preferred_element_type=jnp.float32)
    ffrec = out[:HID, :]         # == (1 - leak_v)  * (ff + rec)
    pooled = out[HID:, :]        # == (1 - leak_pt) * avg_pool(mean|x|), per channel

    lv = par_ref[0]              # (HID, 1)  sigmoid(leak_v)
    lpt = par_ref[1]             # (HID, 1)  sigmoid(leak_pt)
    t0c = par_ref[2]             # (HID, 1)  max(t0, 0.01)
    t1c = par_ref[3]             # (HID, 1)  max(t1, 0)

    v = v_ref[0]                 # (HID, H*W)
    z = z_ref[0]
    pt = pt_ref[0]

    pt_out = pt * lpt + pooled
    thresh = t0c + t1c * pt_out
    # soft reset (hard_reset=False); reset term uses the *previous* trace pt
    v_out = v * lv + ffrec - z * (t0c + t1c * pt)
    z_out = (v_out > thresh).astype(jnp.float32)   # arctanspike forward = Heaviside

    v_out_ref[0] = v_out
    z_out_ref[0] = z_out
    pt_out_ref[0] = pt_out


def conv_xlif_recurrent(x, prev_state, w_ff, w_rec,
                        leak_v, leak_pt, t0, t1, kernel_size=3):
    """x: (B,CIN,H,W) f32.  prev_state: (3,B,HID,H,W) = [v, z, pt].
    w_ff: (HID,CIN,K,K), w_rec: (HID,HID,K,K)  (PyTorch OIHW layout).
    Returns (z_out, new_state) with new_state = stack([v_out, z_out, pt_out])."""
    B, CIN, H, W = x.shape
    HID = w_ff.shape[0]
    K = kernel_size
    p = K // 2
    C = CIN + HID + 1                   # [x channels | z channels | mean|x|]
    HW = H * W
    KC = K * K * C
    KCP = ((KC + 127) // 128) * 128     # pad contraction dim to a lane multiple
    NOUT = 2 * HID

    v, z, pt = prev_state[0], prev_state[1], prev_state[2]

    # ---- cheap XLA-side prep (hoisted out of the kernel hot path) ------------
    lv = jax.nn.sigmoid(leak_v)
    lpt = jax.nn.sigmoid(leak_pt)
    t0c = jnp.maximum(t0, 0.01)
    t1c = jnp.maximum(t1, 0.0)
    params = jnp.stack([lv, lpt, t0c, t1c]).astype(jnp.float32).reshape(4, HID, 1)

    # im2col slab in channel-major order: (B, K*K*C, H*W), rows grouped tap-major.
    am = jnp.mean(jnp.abs(x), axis=1, keepdims=True)            # (B,1,H,W)
    xa = jnp.concatenate([x, z, am], axis=1)                    # (B,C,H,W)
    xa = jnp.pad(xa, ((0, 0), (0, 0), (p, p), (p, p)))          # zero halo
    taps = [xa[:, :, i:i + H, j:j + W].reshape(B, C, HW)
            for i in range(K) for j in range(K)]
    slab = jnp.concatenate(taps, axis=1)                        # (B, KC, HW)
    slab = jnp.pad(slab, ((0, 0), (0, KCP - KC), (0, 0)))       # (B, KCP, HW)

    # fused weight slab (2*HID, KCP); (1-leak) and 1/K^2 pool weight folded in.
    one_m_lv = (1.0 - lv)[:, None]
    one_m_lpt = (1.0 - lpt)[:, None]
    pool_rows = jnp.concatenate(
        [jnp.zeros((HID, CIN + HID), jnp.float32),
         one_m_lpt * (1.0 / (K * K))], axis=1)                  # (HID, C), same per tap
    wtaps = []
    for i in range(K):
        for j in range(K):
            conv_rows = jnp.concatenate(
                [w_ff[:, :, i, j] * one_m_lv,
                 w_rec[:, :, i, j] * one_m_lv,
                 jnp.zeros((HID, 1), jnp.float32)], axis=1)     # (HID, C)
            wtaps.append(jnp.concatenate([conv_rows, pool_rows], axis=0))
    w_fused = jnp.concatenate(wtaps, axis=1)                    # (2*HID, KC)
    w_fused = jnp.pad(w_fused, ((0, 0), (0, KCP - KC)))         # (2*HID, KCP)

    # states in lane-dense channel-major layout (free reshape from NCHW)
    vf = v.reshape(B, HID, HW)
    zf = z.reshape(B, HID, HW)
    ptf = pt.reshape(B, HID, HW)

    # ---- Pallas call ---------------------------------------------------------
    kernel = functools.partial(_xlif_kernel, HID)
    state_spec = pl.BlockSpec((1, HID, HW), lambda b: (b, 0, 0))
    out_shape = [jax.ShapeDtypeStruct((B, HID, HW), jnp.float32)] * 3

    # TODO(synk): if H/W/B are scaled up, add an H*W tiling grid axis and set
    # pltpu.CompilerParams(vmem_limit_bytes=...) (v7x has only 64 MiB VMEM).
    v_out, z_out, pt_out = pl.pallas_call(
        kernel,
        out_shape=out_shape,
        grid_spec=pltpu.PrefetchScalarGridSpec(
            num_scalar_prefetch=0,
            grid=(B,),
            in_specs=[
                pl.BlockSpec((1, KCP, HW), lambda b: (b, 0, 0)),   # im2col slab
                pl.BlockSpec((NOUT, KCP), lambda b: (0, 0)),       # fused weights
                state_spec, state_spec, state_spec,                # v, z, pt
                pl.BlockSpec((4, HID, 1), lambda b: (0, 0, 0)),    # params
            ],
            out_specs=[state_spec, state_spec, state_spec],
        ),
        compiler_params=pltpu.CompilerParams(
            dimension_semantics=("parallel",)),
    )(slab, w_fused, vf, zf, ptf, params)

    z_out = z_out.reshape(B, HID, H, W)
    new_state = jnp.stack([v_out.reshape(B, HID, H, W), z_out,
                           pt_out.reshape(B, HID, H, W)])
    return z_out, new_state


def reference(x, prev_state, w_ff, w_rec, leak_v, leak_pt, t0, t1, K):
    """Pure-JAX NCHW reference mirroring the PyTorch forward (HIGHEST precision)."""
    p = K // 2
    dn = ('NCHW', 'OIHW', 'NCHW')
    prec = lax.Precision.HIGHEST
    v, z, pt = prev_state[0], prev_state[1], prev_state[2]
    ff = lax.conv_general_dilated(x, w_ff, (1, 1), [(p, p), (p, p)],
                                  dimension_numbers=dn, precision=prec)
    rec = lax.conv_general_dilated(z, w_rec, (1, 1), [(p, p), (p, p)],
                                   dimension_numbers=dn, precision=prec)
    t0c = jnp.maximum(t0, 0.01)[None, :, None, None]
    t1c = jnp.maximum(t1, 0.0)[None, :, None, None]
    lv = jax.nn.sigmoid(leak_v)[None, :, None, None]
    lpt = jax.nn.sigmoid(leak_pt)[None, :, None, None]
    am = jnp.mean(jnp.abs(x), axis=1, keepdims=True)
    ones = jnp.ones((1, 1, K, K), jnp.float32) / (K * K)
    pooled = lax.conv_general_dilated(am, ones, (1, 1), [(p, p), (p, p)],
                                      dimension_numbers=dn, precision=prec)
    pt_out = pt * lpt + (1.0 - lpt) * pooled
    thresh = t0c + t1c * pt_out
    v_out = v * lv + (1.0 - lv) * (ff + rec) - z * (t0c + t1c * pt)
    z_out = (v_out > thresh).astype(jnp.float32)
    return z_out, jnp.stack([v_out, z_out, pt_out])


if __name__ == "__main__":
    B, CIN, HID, H, W, K = 2, 4, 32, 16, 16, 3

    key = jax.random.PRNGKey(0)
    keys = jax.random.split(key, 10)

    # deterministic synthetic parameters (shapes from the module __init__)
    w_scale_ff = math.sqrt(1.0 / CIN)
    w_scale_rec = math.sqrt(1.0 / HID)
    w_ff = jax.random.uniform(keys[0], (HID, CIN, K, K), jnp.float32,
                              -w_scale_ff, w_scale_ff)
    w_rec = jax.random.uniform(keys[1], (HID, HID, K, K), jnp.float32,
                               -w_scale_rec, w_scale_rec)
    leak_v = jax.random.normal(keys[2], (HID,), jnp.float32) * 0.1 + (-4.0)
    leak_pt = jax.random.normal(keys[3], (HID,), jnp.float32) * 0.1 + (-4.0)
    t0 = jnp.full((HID,), 0.01, jnp.float32)     # t0 init: mean 0.01, std 0.0
    t1 = jnp.full((HID,), 1.8, jnp.float32)      # t1 init: mean 1.8,  std 0.0

    # inputs: PyTorch NCHW, x of shape (2, 4, 16, 16)
    x = jax.random.normal(keys[6], (B, CIN, H, W), jnp.float32)
    v0 = jax.random.normal(keys[7], (B, HID, H, W), jnp.float32) * 0.1
    z0 = (jax.random.uniform(keys[8], (B, HID, H, W)) > 0.5).astype(jnp.float32)
    pt0 = jnp.abs(jax.random.normal(keys[9], (B, HID, H, W), jnp.float32)) * 0.1
    prev_state = jnp.stack([v0, z0, pt0])

    fwd = jax.jit(conv_xlif_recurrent, static_argnames=("kernel_size",))
    z_out, state = fwd(x, prev_state, w_ff, w_rec,
                       leak_v, leak_pt, t0, t1, kernel_size=K)
    jax.block_until_ready((z_out, state))

    # correctness check vs pure-JAX reference
    z_ref, state_ref = reference(x, prev_state, w_ff, w_rec,
                                 leak_v, leak_pt, t0, t1, K)
    err_v = float(jnp.max(jnp.abs(state[0] - state_ref[0])))
    err_pt = float(jnp.max(jnp.abs(state[2] - state_ref[2])))

    # z is a hard Heaviside of v_out against a data-dependent threshold, so it
    # is checked exactly only away from the threshold boundary (spike flips in
    # the rounding-error band are expected/documented behavior).
    t0c = jnp.maximum(t0, 0.01)[None, :, None, None]
    t1c = jnp.maximum(t1, 0.0)[None, :, None, None]
    thresh_ref = t0c + t1c * state_ref[2]
    safe = jnp.abs(state_ref[0] - thresh_ref) > 1e-1
    z_exact_safe = bool(jnp.all(jnp.where(safe, z_out == z_ref, True)))
    z_flip_frac = float(jnp.mean(jnp.abs(z_out - z_ref)))

    assert z_out.shape == (B, HID, H, W) and state.shape == (3, B, HID, H, W)
    assert err_v < 5e-2, f"v_out mismatch {err_v}"
    assert err_pt < 5e-2, f"pt_out mismatch {err_pt}"
    assert z_exact_safe, "z_out mismatch away from threshold boundary"
    assert z_flip_frac < 2e-2, f"z_out flip fraction {z_flip_frac}"

    print("KERNEL_OK")
</pallas_src>

<mosaic_0001>
module attributes {stable_mosaic.version = 11 : i64} {
  func.func @_xlif_kernel(%arg0: i32, %arg1: memref<1x384x256xf32, #tpu.memory_space<vmem>>, %arg2: memref<64x384xf32, #tpu.memory_space<vmem>>, %arg3: memref<1x32x256xf32, #tpu.memory_space<vmem>>, %arg4: memref<1x32x256xf32, #tpu.memory_space<vmem>>, %arg5: memref<1x32x256xf32, #tpu.memory_space<vmem>>, %arg6: memref<4x32x1xf32, #tpu.memory_space<vmem>>, %arg7: memref<1x32x256xf32, #tpu.memory_space<vmem>>, %arg8: memref<1x32x256xf32, #tpu.memory_space<vmem>>, %arg9: memref<1x32x256xf32, #tpu.memory_space<vmem>>) attributes {dimension_semantics = [#tpu.dimension_semantics<parallel>], iteration_bounds = array<i64: 2>, scalar_prefetch = 0 : i64, scratch_operands = 0 : i64, tpu.core_type = #tpu.core_type<tc>, window_params = [{transform_indices = @transform_0, window_bounds = array<i64: 1, 384, 256>}, {pipeline_mode = #tpu.pipeline_mode<synchronous>, transform_indices = @transform_1, window_bounds = array<i64: 64, 384>}, {transform_indices = @transform_2, window_bounds = array<i64: 1, 32, 256>}, {transform_indices = @transform_3, window_bounds = array<i64: 1, 32, 256>}, {transform_indices = @transform_4, window_bounds = array<i64: 1, 32, 256>}, {pipeline_mode = #tpu.pipeline_mode<synchronous>, transform_indices = @transform_5, window_bounds = array<i64: 4, 32, 1>}, {transform_indices = @transform_6, window_bounds = array<i64: 1, 32, 256>}, {transform_indices = @transform_7, window_bounds = array<i64: 1, 32, 256>}, {transform_indices = @transform_8, window_bounds = array<i64: 1, 32, 256>}]} {
    %c0 = arith.constant 0 : index
    %c0_0 = arith.constant 0 : index
    %0 = vector.load %arg2[%c0, %c0_0] : memref<64x384xf32, #tpu.memory_space<vmem>>, vector<64x384xf32>
    %c0_1 = arith.constant 0 : index
    %c0_2 = arith.constant 0 : index
    %c0_3 = arith.constant 0 : index
    %1 = vector.load %arg1[%c0_1, %c0_2, %c0_3] : memref<1x384x256xf32, #tpu.memory_space<vmem>>, vector<1x384x256xf32>
    %2 = vector.shape_cast %1 : vector<1x384x256xf32> to vector<384x256xf32>
    %cst = arith.constant dense<0.000000e+00> : vector<64x256xf32>
    %3 = tpu.matmul %0, %2, %cst {dimension_numbers = #tpu.dot_dimension_numbers<[1], [0], [0], [1], [0, 0, 1, 1], [], []>} : vector<64x384xf32>, vector<384x256xf32>, vector<64x256xf32> -> vector<64x256xf32>
    %4 = vector.extract_strided_slice %3 {offsets = [0, 0], sizes = [32, 256], strides = [1, 1]} : vector<64x256xf32> to vector<32x256xf32>
    %5 = vector.extract_strided_slice %3 {offsets = [32, 0], sizes = [32, 256], strides = [1, 1]} : vector<64x256xf32> to vector<32x256xf32>
    %c0_4 = arith.constant 0 : index
    %c0_5 = arith.constant 0 : index
    %c0_6 = arith.constant 0 : index
    %6 = vector.load %arg6[%c0_4, %c0_5, %c0_6] : memref<4x32x1xf32, #tpu.memory_space<vmem>>, vector<1x32x1xf32>
    %7 = vector.shape_cast %6 : vector<1x32x1xf32> to vector<32x1xf32>
    %c1 = arith.constant 1 : index
    %c0_7 = arith.constant 0 : index
    %c0_8 = arith.constant 0 : index
    %8 = vector.load %arg6[%c1, %c0_7, %c0_8] : memref<4x32x1xf32, #tpu.memory_space<vmem>>, vector<1x32x1xf32>
    %9 = vector.shape_cast %8 : vector<1x32x1xf32> to vector<32x1xf32>
    %c2 = arith.constant 2 : index
    %c0_9 = arith.constant 0 : index
    %c0_10 = arith.constant 0 : index
    %10 = vector.load %arg6[%c2, %c0_9, %c0_10] : memref<4x32x1xf32, #tpu.memory_space<vmem>>, vector<1x32x1xf32>
    %11 = vector.shape_cast %10 : vector<1x32x1xf32> to vector<32x1xf32>
    %c3 = arith.constant 3 : index
    %c0_11 = arith.constant 0 : index
    %c0_12 = arith.constant 0 : index
    %12 = vector.load %arg6[%c3, %c0_11, %c0_12] : memref<4x32x1xf32, #tpu.memory_space<vmem>>, vector<1x32x1xf32>
    %13 = vector.shape_cast %12 : vector<1x32x1xf32> to vector<32x1xf32>
    %c0_13 = arith.constant 0 : index
    %c0_14 = arith.constant 0 : index
    %c0_15 = arith.constant 0 : index
    %14 = vector.load %arg3[%c0_13, %c0_14, %c0_15] : memref<1x32x256xf32, #tpu.memory_space<vmem>>, vector<1x32x256xf32>
    %15 = vector.shape_cast %14 : vector<1x32x256xf32> to vector<32x256xf32>
    %c0_16 = arith.constant 0 : index
    %c0_17 = arith.constant 0 : index
    %c0_18 = arith.constant 0 : index
    %16 = vector.load %arg4[%c0_16, %c0_17, %c0_18] : memref<1x32x256xf32, #tpu.memory_space<vmem>>, vector<1x32x256xf32>
    %17 = vector.shape_cast %16 : vector<1x32x256xf32> to vector<32x256xf32>
    %c0_19 = arith.constant 0 : index
    %c0_20 = arith.constant 0 : index
    %c0_21 = arith.constant 0 : index
    %18 = vector.load %arg5[%c0_19, %c0_20, %c0_21] : memref<1x32x256xf32, #tpu.memory_space<vmem>>, vector<1x32x256xf32>
    %19 = vector.shape_cast %18 : vector<1x32x256xf32> to vector<32x256xf32>
    %20 = vector.broadcast %9 : vector<32x1xf32> to vector<32x256xf32>
    %21 = arith.mulf %19, %20 : vector<32x256xf32>
    %22 = arith.addf %21, %5 : vector<32x256xf32>
    %23 = vector.broadcast %13 : vector<32x1xf32> to vector<32x256xf32>
    %24 = arith.mulf %23, %22 : vector<32x256xf32>
    %25 = vector.broadcast %11 : vector<32x1xf32> to vector<32x256xf32>
    %26 = arith.addf %25, %24 : vector<32x256xf32>
    %27 = vector.broadcast %7 : vector<32x1xf32> to vector<32x256xf32>
    %28 = arith.mulf %15, %27 : vector<32x256xf32>
    %29 = arith.addf %28, %4 : vector<32x256xf32>
    %30 = vector.broadcast %13 : vector<32x1xf32> to vector<32x256xf32>
    %31 = arith.mulf %30, %19 : vector<32x256xf32>
    %32 = vector.broadcast %11 : vector<32x1xf32> to vector<32x256xf32>
    %33 = arith.addf %32, %31 : vector<32x256xf32>
    %34 = arith.mulf %17, %33 : vector<32x256xf32>
    %35 = arith.subf %29, %34 : vector<32x256xf32>
    %36 = arith.cmpf ogt, %35, %26 : vector<32x256xf32>
    %37 = arith.extui %36 : vector<32x256xi1> to vector<32x256xi32>
    %38 = arith.sitofp %37 : vector<32x256xi32> to vector<32x256xf32>
    %c0_22 = arith.constant 0 : index
    %c0_23 = arith.constant 0 : index
    %c0_24 = arith.constant 0 : index
    %39 = vector.load %arg7[%c0_22, %c0_23, %c0_24] : memref<1x32x256xf32, #tpu.memory_space<vmem>>, vector<1x32x256xf32>
    %40 = vector.shape_cast %39 : vector<1x32x256xf32> to vector<32x256xf32>
    %41 = vector.shape_cast %35 : vector<32x256xf32> to vector<1x32x256xf32>
    tpu.vector_store %arg7[%c0_22, %c0_23, %c0_24], %41 {strides = array<i32>} : memref<1x32x256xf32, #tpu.memory_space<vmem>>, vector<1x32x256xf32>,
    %c0_25 = arith.constant 0 : index
    %c0_26 = arith.constant 0 : index
    %c0_27 = arith.constant 0 : index
    %42 = vector.load %arg8[%c0_25, %c0_26, %c0_27] : memref<1x32x256xf32, #tpu.memory_space<vmem>>, vector<1x32x256xf32>
    %43 = vector.shape_cast %42 : vector<1x32x256xf32> to vector<32x256xf32>
    %44 = vector.shape_cast %38 : vector<32x256xf32> to vector<1x32x256xf32>
    tpu.vector_store %arg8[%c0_25, %c0_26, %c0_27], %44 {strides = array<i32>} : memref<1x32x256xf32, #tpu.memory_space<vmem>>, vector<1x32x256xf32>,
    %c0_28 = arith.constant 0 : index
    %c0_29 = arith.constant 0 : index
    %c0_30 = arith.constant 0 : index
    %45 = vector.load %arg9[%c0_28, %c0_29, %c0_30] : memref<1x32x256xf32, #tpu.memory_space<vmem>>, vector<1x32x256xf32>
    %46 = vector.shape_cast %45 : vector<1x32x256xf32> to vector<32x256xf32>
    %47 = vector.shape_cast %22 : vector<32x256xf32> to vector<1x32x256xf32>
    tpu.vector_store %arg9[%c0_28, %c0_29, %c0_30], %47 {strides = array<i32>} : memref<1x32x256xf32, #tpu.memory_space<vmem>>, vector<1x32x256xf32>,
    return
  }
  func.func @transform_0(%arg0: i32) -> (i32, i32, i32) {
    %c0_i32 = arith.constant 0 : i32
    %c0_i32_0 = arith.constant 0 : i32
    %c0_i32_1 = arith.constant 0 : i32
    return %arg0, %c0_i32, %c0_i32_0 : i32, i32, i32
  }
  func.func @transform_1(%arg0: i32) -> (i32, i32) {
    %c0_i32 = arith.constant 0 : i32
    %c0_i32_0 = arith.constant 0 : i32
    %c0_i32_1 = arith.constant 0 : i32
    return %c0_i32, %c0_i32_0 : i32, i32
  }
  func.func @transform_2(%arg0: i32) -> (i32, i32, i32) {
    %c0_i32 = arith.constant 0 : i32
    %c0_i32_0 = arith.constant 0 : i32
    %c0_i32_1 = arith.constant 0 : i32
    return %arg0, %c0_i32, %c0_i32_0 : i32, i32, i32
  }
  func.func @transform_3(%arg0: i32) -> (i32, i32, i32) {
    %c0_i32 = arith.constant 0 : i32
    %c0_i32_0 = arith.constant 0 : i32
    %c0_i32_1 = arith.constant 0 : i32
    return %arg0, %c0_i32, %c0_i32_0 : i32, i32, i32
  }
  func.func @transform_4(%arg0: i32) -> (i32, i32, i32) {
    %c0_i32 = arith.constant 0 : i32
    %c0_i32_0 = arith.constant 0 : i32
    %c0_i32_1 = arith.constant 0 : i32
    return %arg0, %c0_i32, %c0_i32_0 : i32, i32, i32
  }
  func.func @transform_5(%arg0: i32) -> (i32, i32, i32) {
    %c0_i32 = arith.constant 0 : i32
    %c0_i32_0 = arith.constant 0 : i32
    %c0_i32_1 = arith.constant 0 : i32
    %c0_i32_2 = arith.constant 0 : i32
    return %c0_i32, %c0_i32_0, %c0_i32_1 : i32, i32, i32
  }
  func.func @transform_6(%arg0: i32) -> (i32, i32, i32) {
    %c0_i32 = arith.constant 0 : i32
    %c0_i32_0 = arith.constant 0 : i32
    %c0_i32_1 = arith.constant 0 : i32
    return %arg0, %c0_i32, %c0_i32_0 : i32, i32, i32
  }
  func.func @transform_7(%arg0: i32) -> (i32, i32, i32) {
    %c0_i32 = arith.constant 0 : i32
    %c0_i32_0 = arith.constant 0 : i32
    %c0_i32_1 = arith.constant 0 : i32
    return %arg0, %c0_i32, %c0_i32_0 : i32, i32, i32
  }
  func.func @transform_8(%arg0: i32) -> (i32, i32, i32) {
    %c0_i32 = arith.constant 0 : i32
    %c0_i32_0 = arith.constant 0 : i32
    %c0_i32_1 = arith.constant 0 : i32
    return %arg0, %c0_i32, %c0_i32_0 : i32, i32, i32
  }
}

</mosaic_0001>

<llo_original>
// kernel: conv_xlif_recurrent.1
$region0: #{conv_xlif_recurrent.1}
  #allocation0 [shape = 'u32[]', space=smem, size = 0x4, offset = 0x4, fixed_abs, tag = 'smem constant byte address 0x4 - core index']
  #allocation1 [shape = 'u32[72,128]{1,0:T(1,128)}', space=vmem, size = 0x9000, scoped, tag = 'internal scratch']
  %s0 = inlined_call_operand.vmem [shape: f32[2,384,256], index: 0, kind: input, shape index: {}]
  %s1 = inlined_call_operand.vmem [shape: f32[64,384], index: 1, kind: input, shape index: {}]
  %s2 = inlined_call_operand.vmem [shape: f32[2,32,256], index: 2, kind: input, shape index: {}]
  %s3 = inlined_call_operand.vmem [shape: f32[2,32,256], index: 3, kind: input, shape index: {}]
  %s4 = inlined_call_operand.vmem [shape: f32[2,32,256], index: 4, kind: input, shape index: {}]
  %s5 = inlined_call_operand.vmem [shape: f32[4,32,1], index: 5, kind: input, shape index: {}]
  %s6 = inlined_call_operand.vmem [shape: f32[2,32,256], index: 6, kind: output, shape index: {0}]
  %s7 = inlined_call_operand.vmem [shape: f32[2,32,256], index: 7, kind: output, shape index: {1}]
  %s8 = inlined_call_operand.vmem [shape: f32[2,32,256], index: 8, kind: output, shape index: {2}]
  %9 = xla_tuple %s6, %s7, %s8
  %s10 = sld [smem:[#allocation0]]
  $region73: #{conv_xlif_recurrent.1} parent=0
    _
  %s12 = ssub.s32 1, %s10
  %s13 = scalar_select 0, %s12, %s10
  loop: start=0, step=1, limit=4
  $region2: #{conv_xlif_recurrent.1} parent=0 // loop_pre_header
    _
  $region3: #{conv_xlif_recurrent.1} parent=0 // loop_header
    %s15 = sphi 0, %s19
    %p16 = scmp.ge.s32.totalorder %s15, 4
    %s25 = sphi 0, %s27
    %s28 = sphi 0, %s25
    %s29 = sphi 0, %s28
    %s45 = sphi 0, %s29
    %s49 = sphi 0, %s49
    %s51 = sphi 0, %s49
    %s52 = sphi 0, %s51
    %s66 = sphi 0, %s52
    %s72 = sphi 0, %s74
    %s75 = sphi 0, %s72
    %s76 = sphi 0, %s75
    %s92 = sphi 0, %s76
    %s98 = sphi 0, %s100
    %s101 = sphi 0, %s98
    %s102 = sphi 0, %s101
    %s118 = sphi 0, %s102
    %s124 = sphi 0, %s126
    %s127 = sphi 0, %s124
    %s128 = sphi 0, %s127
    %s144 = sphi 0, %s128
    %s148 = sphi 0, %s148
    %s150 = sphi 0, %s148
    %s151 = sphi 0, %s150
    %s165 = sphi 0, %s151
    %s171 = sphi 0, %s173
    %s174 = sphi 0, %s171
    %s175 = sphi 0, %s174
    %s191 = sphi 0, %s175
    %s197 = sphi 0, %s199
    %s200 = sphi 0, %s197
    %s201 = sphi 0, %s200
    %s217 = sphi 0, %s201
    %s223 = sphi 0, %s225
    %s226 = sphi 0, %s223
    %s227 = sphi 0, %s226
    %s243 = sphi 0, %s227
  $region4: #{conv_xlif_recurrent.1} parent=0 // loop_header_branch
    %18 = sbr.rel (%p16) target = $region8
  $region5: #{conv_xlif_recurrent.1} parent=0 // loop_body
    %s20 = ssub.s32 %s15, 1
    %s21 = ssub.s32 %s15, 2
    %s22 = sadd.s32 %s15, 1
    %s23 = ssub.s32 %s15, %s22
    %p24 = scmp.eq.s32.totalorder %s23, 0
    %s26 = sadd.s32 %s25, 1
    %s27 = scalar_select %p24, %s25, %s26
    %p30 = pneg %p24
    %p31 = scmp.eq.s32.totalorder %s15, 1
    %p32 = por %p30, %p31
    %p33 = scmp.ne.s32.totalorder %s25, %s28
    %p34 = scmp.eq.s32.totalorder %s15, 0
    %p35 = por %p33, %p34
    %p36 = scmp.ne.s32.totalorder %s25, %s28
    %p37 = scmp.eq.s32.totalorder %s20, 1
    %p38 = por %p36, %p37
    %p39 = scmp.ne.s32.totalorder %s28, %s29
    %p40 = scmp.eq.s32.totalorder %s20, 0
    %p41 = por %p39, %p40
    %p42 = scmp.ne.s32.totalorder %s28, %s29
    %p43 = scmp.eq.s32.totalorder %s21, 1
    %p44 = por %p42, %p43
    %p46 = scmp.ne.s32.totalorder %s29, %s45
    %p47 = scmp.eq.s32.totalorder %s21, 0
    %p48 = por %p46, %p47
    %s50 = sadd.s32 %s49, 1
    %p53 = scmp.eq.s32.totalorder %s15, 1
    %p54 = scmp.ne.s32.totalorder %s49, %s51
    %p55 = scmp.eq.s32.totalorder %s15, 0
    %p56 = por %p54, %p55
    %p57 = scmp.ne.s32.totalorder %s49, %s51
    %p58 = scmp.eq.s32.totalorder %s20, 1
    %p59 = por %p57, %p58
    %p60 = scmp.ne.s32.totalorder %s51, %s52
    %p61 = scmp.eq.s32.totalorder %s20, 0
    %p62 = por %p60, %p61
    %p63 = scmp.ne.s32.totalorder %s51, %s52
    %p64 = scmp.eq.s32.totalorder %s21, 1
    %p65 = por %p63, %p64
    %p67 = scmp.ne.s32.totalorder %s52, %s66
    %p68 = scmp.eq.s32.totalorder %s21, 0
    %p69 = por %p67, %p68
    %s70 = ssub.s32 %s15, %s22
    %p71 = scmp.eq.s32.totalorder %s70, 0
    %s73 = sadd.s32 %s72, 1
    %s74 = scalar_select %p71, %s72, %s73
    %p77 = pneg %p71
    %p78 = scmp.eq.s32.totalorder %s15, 1
    %p79 = por %p77, %p78
    %p80 = scmp.ne.s32.totalorder %s72, %s75
    %p81 = scmp.eq.s32.totalorder %s15, 0
    %p82 = por %p80, %p81
    %p83 = scmp.ne.s32.totalorder %s72, %s75
    %p84 = scmp.eq.s32.totalorder %s20, 1
    %p85 = por %p83, %p84
    %p86 = scmp.ne.s32.totalorder %s75, %s76
    %p87 = scmp.eq.s32.totalorder %s20, 0
    %p88 = por %p86, %p87
    %p89 = scmp.ne.s32.totalorder %s75, %s76
    %p90 = scmp.eq.s32.totalorder %s21, 1
    %p91 = por %p89, %p90
    %p93 = scmp.ne.s32.totalorder %s76, %s92
    %p94 = scmp.eq.s32.totalorder %s21, 0
    %p95 = por %p93, %p94
    %s96 = ssub.s32 %s15, %s22
    %p97 = scmp.eq.s32.totalorder %s96, 0
    %s99 = sadd.s32 %s98, 1
    %s100 = scalar_select %p97, %s98, %s99
    %p103 = pneg %p97
    %p104 = scmp.eq.s32.totalorder %s15, 1
    %p105 = por %p103, %p104
    %p106 = scmp.ne.s32.totalorder %s98, %s101
    %p107 = scmp.eq.s32.totalorder %s15, 0
    %p108 = por %p106, %p107
    %p109 = scmp.ne.s32.totalorder %s98, %s101
    %p110 = scmp.eq.s32.totalorder %s20, 1
    %p111 = por %p109, %p110
    %p112 = scmp.ne.s32.totalorder %s101, %s102
    %p113 = scmp.eq.s32.totalorder %s20, 0
    %p114 = por %p112, %p113
    %p115 = scmp.ne.s32.totalorder %s101, %s102
    %p116 = scmp.eq.s32.totalorder %s21, 1
    %p117 = por %p115, %p116
    %p119 = scmp.ne.s32.totalorder %s102, %s118
    %p120 = scmp.eq.s32.totalorder %s21, 0
    %p121 = por %p119, %p120
    %s122 = ssub.s32 %s15, %s22
    %p123 = scmp.eq.s32.totalorder %s122, 0
    %s125 = sadd.s32 %s124, 1
    %s126 = scalar_select %p123, %s124, %s125
    %p129 = pneg %p123
    %p130 = scmp.eq.s32.totalorder %s15, 1
    %p131 = por %p129, %p130
    %p132 = scmp.ne.s32.totalorder %s124, %s127
    %p133 = scmp.eq.s32.totalorder %s15, 0
    %p134 = por %p132, %p133
    %p135 = scmp.ne.s32.totalorder %s124, %s127
    %p136 = scmp.eq.s32.totalorder %s20, 1
    %p137 = por %p135, %p136
    %p138 = scmp.ne.s32.totalorder %s127, %s128
    %p139 = scmp.eq.s32.totalorder %s20, 0
    %p140 = por %p138, %p139
    %p141 = scmp.ne.s32.totalorder %s127, %s128
    %p142 = scmp.eq.s32.totalorder %s21, 1
    %p143 = por %p141, %p142
    %p145 = scmp.ne.s32.totalorder %s128, %s144
    %p146 = scmp.eq.s32.totalorder %s21, 0
    %p147 = por %p145, %p146
    %s149 = sadd.s32 %s148, 1
    %p152 = scmp.eq.s32.totalorder %s15, 1
    %p153 = scmp.ne.s32.totalorder %s148, %s150
    %p154 = scmp.eq.s32.totalorder %s15, 0
    %p155 = por %p153, %p154
    %p156 = scmp.ne.s32.totalorder %s148, %s150
    %p157 = scmp.eq.s32.totalorder %s20, 1
    %p158 = por %p156, %p157
    %p159 = scmp.ne.s32.totalorder %s150, %s151
    %p160 = scmp.eq.s32.totalorder %s20, 0
    %p161 = por %p159, %p160
    %p162 = scmp.ne.s32.totalorder %s150, %s151
    %p163 = scmp.eq.s32.totalorder %s21, 1
    %p164 = por %p162, %p163
    %p166 = scmp.ne.s32.totalorder %s151, %s165
    %p167 = scmp.eq.s32.totalorder %s21, 0
    %p168 = por %p166, %p167
    %s169 = ssub.s32 %s15, %s22
    %p170 = scmp.eq.s32.totalorder %s169, 0
    %s172 = sadd.s32 %s171, 1
    %s173 = scalar_select %p170, %s171, %s172
    %p176 = pneg %p170
    %p177 = scmp.eq.s32.totalorder %s15, 1
    %p178 = por %p176, %p177
    %p179 = scmp.ne.s32.totalorder %s171, %s174
    %p180 = scmp.eq.s32.totalorder %s15, 0
    %p181 = por %p179, %p180
    %p182 = scmp.ne.s32.totalorder %s171, %s174
    %p183 = scmp.eq.s32.totalorder %s20, 1
    %p184 = por %p182, %p183
    %p185 = scmp.ne.s32.totalorder %s174, %s175
    %p186 = scmp.eq.s32.totalorder %s20, 0
    %p187 = por %p185, %p186
    %p188 = scmp.ne.s32.totalorder %s174, %s175
    %p189 = scmp.eq.s32.totalorder %s21, 1
    %p190 = por %p188, %p189
    %p192 = scmp.ne.s32.totalorder %s175, %s191
    %p193 = scmp.eq.s32.totalorder %s21, 0
    %p194 = por %p192, %p193
    %s195 = ssub.s32 %s15, %s22
    %p196 = scmp.eq.s32.totalorder %s195, 0
    %s198 = sadd.s32 %s197, 1
    %s199 = scalar_select %p196, %s197, %s198
    %p202 = pneg %p196
    %p203 = scmp.eq.s32.totalorder %s15, 1
    %p204 = por %p202, %p203
    %p205 = scmp.ne.s32.totalorder %s197, %s200
    %p206 = scmp.eq.s32.totalorder %s15, 0
    %p207 = por %p205, %p206
    %p208 = scmp.ne.s32.totalorder %s197, %s200
    %p209 = scmp.eq.s32.totalorder %s20, 1
    %p210 = por %p208, %p209
    %p211 = scmp.ne.s32.totalorder %s200, %s201
    %p212 = scmp.eq.s32.totalorder %s20, 0
    %p213 = por %p211, %p212
    %p214 = scmp.ne.s32.totalorder %s200, %s201
    %p215 = scmp.eq.s32.totalorder %s21, 1
    %p216 = por %p214, %p215
    %p218 = scmp.ne.s32.totalorder %s201, %s217
    %p219 = scmp.eq.s32.totalorder %s21, 0
    %p220 = por %p218, %p219
    %s221 = ssub.s32 %s15, %s22
    %p222 = scmp.eq.s32.totalorder %s221, 0
    %s224 = sadd.s32 %s223, 1
    %s225 = scalar_select %p222, %s223, %s224
    %p228 = pneg %p222
    %p229 = scmp.eq.s32.totalorder %s15, 1
    %p230 = por %p228, %p229
    %p231 = scmp.ne.s32.totalorder %s223, %s226
    %p232 = scmp.eq.s32.totalorder %s15, 0
    %p233 = por %p231, %p232
    %p234 = scmp.ne.s32.totalorder %s223, %s226
    %p235 = scmp.eq.s32.totalorder %s20, 1
    %p236 = por %p234, %p235
    %p237 = scmp.ne.s32.totalorder %s226, %s227
    %p238 = scmp.eq.s32.totalorder %s20, 0
    %p239 = por %p237, %p238
    %p240 = scmp.ne.s32.totalorder %s226, %s227
    %p241 = scmp.eq.s32.totalorder %s21, 1
    %p242 = por %p240, %p241
    %p244 = scmp.ne.s32.totalorder %s227, %s243
    %p245 = scmp.eq.s32.totalorder %s21, 0
    %p246 = por %p244, %p245
    %p247 = scmp.le.s32.totalorder 1, %s15
    %p248 = scmp.lt.s32.totalorder %s15, 3
    %p249 = pnand %p247, %p248
    %p250 = pneg %p249
    // Predicated region
    $region9: #{conv_xlif_recurrent.1} parent=5 // pred_check
      _
    $region10: #{conv_xlif_recurrent.1} parent=5 // pred_check_branch
      %252 = sbr.rel (%p249) target = $region12
    $region11: #{conv_xlif_recurrent.1} parent=5 // pred_region
      %s253 = ssub.s32 %s15, 1
      // Predicated region
      $region13: #{conv_xlif_recurrent.1} parent=11 // pred_check
        %p254 = pneg %p62
      $region14: #{conv_xlif_recurrent.1} parent=11 // pred_check_branch
        %256 = sbr.rel (%p254) target = $region16
      $region15: #{conv_xlif_recurrent.1} parent=11 // pred_region
        _
      $region16: #{conv_xlif_recurrent.1} parent=11 // pred_fallthru
        _
      // Predicated region
      $region17: #{conv_xlif_recurrent.1} parent=11 // pred_check
        %p257 = pneg %p161
      $region18: #{conv_xlif_recurrent.1} parent=11 // pred_check_branch
        %259 = sbr.rel (%p257) target = $region20
      $region19: #{conv_xlif_recurrent.1} parent=11 // pred_region
        _
      $region20: #{conv_xlif_recurrent.1} parent=11 // pred_fallthru
        _
    $region12: #{conv_xlif_recurrent.1} parent=5 // pred_fallthru
      _
    %p260 = scmp.lt.s32.totalorder %s15, 2
    // Predicated region
    $region21: #{conv_xlif_recurrent.1} parent=5 // pred_check
      %p261 = pneg %p260
    $region22: #{conv_xlif_recurrent.1} parent=5 // pred_check_branch
      %263 = sbr.rel (%p261) target = $region24
    $region23: #{conv_xlif_recurrent.1} parent=5 // pred_region
      // Predicated region
      $region25: #{conv_xlif_recurrent.1} parent=23 // pred_check
        %p264 = pneg %p35
      $region26: #{conv_xlif_recurrent.1} parent=23 // pred_check_branch
        %266 = sbr.rel (%p264) target = $region28
      $region27: #{conv_xlif_recurrent.1} parent=23 // pred_region
        %p267 = scmp.lt.s32.totalorder %s15, 1
        %s268 = scalar_select %p267, %s15, 1
        %s269 = smul.addr %s268, 96
        %s270 = smul.addr %s269, 8
        %s271 = scalar_lea.vmem %s0, %s270
      $region28: #{conv_xlif_recurrent.1} parent=23 // pred_fallthru
        _
      // Predicated region
      $region29: #{conv_xlif_recurrent.1} parent=23 // pred_check
        %p272 = pneg %p82
      $region30: #{conv_xlif_recurrent.1} parent=23 // pred_check_branch
        %274 = sbr.rel (%p272) target = $region32
      $region31: #{conv_xlif_recurrent.1} parent=23 // pred_region
        %p275 = scmp.lt.s32.totalorder %s15, 1
        %s276 = scalar_select %p275, %s15, 1
        %s277 = smul.addr %s276, 8
        %s278 = smul.addr %s277, 8
        %s279 = scalar_lea.vmem %s2, %s278
      $region32: #{conv_xlif_recurrent.1} parent=23 // pred_fallthru
        _
      // Predicated region
      $region33: #{conv_xlif_recurrent.1} parent=23 // pred_check
        %p280 = pneg %p108
      $region34: #{conv_xlif_recurrent.1} parent=23 // pred_check_branch
        %282 = sbr.rel (%p280) target = $region36
      $region35: #{conv_xlif_recurrent.1} parent=23 // pred_region
        %p283 = scmp.lt.s32.totalorder %s15, 1
        %s284 = scalar_select %p283, %s15, 1
        %s285 = smul.addr %s284, 8
        %s286 = smul.addr %s285, 8
        %s287 = scalar_lea.vmem %s3, %s286
      $region36: #{conv_xlif_recurrent.1} parent=23 // pred_fallthru
        _
      // Predicated region
      $region37: #{conv_xlif_recurrent.1} parent=23 // pred_check
        %p288 = pneg %p134
      $region38: #{conv_xlif_recurrent.1} parent=23 // pred_check_branch
        %290 = sbr.rel (%p288) target = $region40
      $region39: #{conv_xlif_recurrent.1} parent=23 // pred_region
        %p291 = scmp.lt.s32.totalorder %s15, 1
        %s292 = scalar_select %p291, %s15, 1
        %s293 = smul.addr %s292, 8
        %s294 = smul.addr %s293, 8
        %s295 = scalar_lea.vmem %s4, %s294
      $region40: #{conv_xlif_recurrent.1} parent=23 // pred_fallthru
        _
    $region24: #{conv_xlif_recurrent.1} parent=5 // pred_fallthru
      _
    %p296 = scmp.le.s32.totalorder 1, %s15
    %p297 = scmp.lt.s32.totalorder %s15, 3
    %p298 = pnand %p296, %p297
    %p299 = pneg %p298
    // Predicated region
    $region41: #{conv_xlif_recurrent.1} parent=5 // pred_check
      _
    $region42: #{conv_xlif_recurrent.1} parent=5 // pred_check_branch
      %301 = sbr.rel (%p298) target = $region44
    $region43: #{conv_xlif_recurrent.1} parent=5 // pred_region
      %s302 = ssub.s32 %s15, 1
      %p303 = scmp.lt.s32.totalorder %s20, 1
      %s304 = scalar_select %p303, %s20, 1
      %s305 = smul.addr %s304, 96
      %s306 = smul.addr %s305, 8
      %s307 = scalar_lea.vmem %s0, %s306
      %p308 = pneg %p41
      %p309 = pneg %p38
      %p310 = pneg %p62
      %p311 = pneg %p59
      %p312 = scmp.lt.s32.totalorder %s20, 1
      %s313 = scalar_select %p312, %s20, 1
      %s314 = smul.addr %s313, 8
      %s315 = smul.addr %s314, 8
      %s316 = scalar_lea.vmem %s2, %s315
      %p317 = pneg %p88
      %p318 = pneg %p85
      %p319 = scmp.lt.s32.totalorder %s20, 1
      %s320 = scalar_select %p319, %s20, 1
      %s321 = smul.addr %s320, 8
      %s322 = smul.addr %s321, 8
      %s323 = scalar_lea.vmem %s3, %s322
      %p324 = pneg %p114
      %p325 = pneg %p111
      %p326 = scmp.lt.s32.totalorder %s20, 1
      %s327 = scalar_select %p326, %s20, 1
      %s328 = smul.addr %s327, 8
      %s329 = smul.addr %s328, 8
      %s330 = scalar_lea.vmem %s4, %s329
      %p331 = pneg %p140
      %p332 = pneg %p137
      %p333 = pneg %p161
      %p334 = pneg %p158
      %p335 = pneg %p187
      %p336 = pneg %p184
      %p337 = scmp.lt.s32.totalorder %s20, 1
      %s338 = scalar_select %p337, %s20, 1
      %s339 = smul.addr %s338, 8
      %s340 = smul.addr %s339, 8
      %s341 = scalar_lea.vmem %s6, %s340
      %p342 = pneg %p213
      %p343 = pneg %p210
      %p344 = scmp.lt.s32.totalorder %s20, 1
      %s345 = scalar_select %p344, %s20, 1
      %s346 = smul.addr %s345, 8
      %s347 = smul.addr %s346, 8
      %s348 = scalar_lea.vmem %s7, %s347
      %p349 = pneg %p239
      %p350 = pneg %p236
      %p351 = scmp.lt.s32.totalorder %s20, 1
      %s352 = scalar_select %p351, %s20, 1
      %s353 = smul.addr %s352, 8
      %s354 = smul.addr %s353, 8
      %s355 = scalar_lea.vmem %s8, %s354
      %p356 = scmp.lt.s32.totalorder %s20, 1
      %s357 = scalar_select %p356, %s20, 1
      %s358 = smul.addr %s357, 96
      %s359 = smul.addr %s358, 8
      %s360 = scalar_lea.vmem %s0, %s359
      %p361 = scmp.lt.s32.totalorder %s20, 1
      %s362 = scalar_select %p361, %s20, 1
      %s363 = smul.addr %s362, 8
      %s364 = smul.addr %s363, 8
      %s365 = scalar_lea.vmem %s2, %s364
      %p366 = scmp.lt.s32.totalorder %s20, 1
      %s367 = scalar_select %p366, %s20, 1
      %s368 = smul.addr %s367, 8
      %s369 = smul.addr %s368, 8
      %s370 = scalar_lea.vmem %s3, %s369
      %p371 = scmp.lt.s32.totalorder %s20, 1
      %s372 = scalar_select %p371, %s20, 1
      %s373 = smul.addr %s372, 8
      %s374 = smul.addr %s373, 8
      %s375 = scalar_lea.vmem %s4, %s374
      %p376 = scmp.lt.s32.totalorder %s20, 1
      %s377 = scalar_select %p376, %s20, 1
      %s378 = smul.addr %s377, 8
      %s379 = smul.addr %s378, 8
      %s380 = scalar_lea.vmem %s6, %s379
      %p381 = scmp.lt.s32.totalorder %s20, 1
      %s382 = scalar_select %p381, %s20, 1
      %s383 = smul.addr %s382, 8
      %s384 = smul.addr %s383, 8
      %s385 = scalar_lea.vmem %s7, %s384
      %p386 = scmp.lt.s32.totalorder %s20, 1
      %s387 = scalar_select %p386, %s20, 1
      %s388 = smul.addr %s387, 8
      %s389 = smul.addr %s388, 8
      %s390 = scalar_lea.vmem %s8, %s389
      %v391 = vld [vmem:[%s1] sm:$0xff]
      %v392 = vld [vmem:[%s1 + $0x8] sm:$0xff]
      %v393 = vld [vmem:[%s1 + $0x10] sm:$0xff]
      %v394 = vld [vmem:[%s1 + $0x18] sm:$0xff]
      %v395 = vld [vmem:[%s1 + $0x20] sm:$0xff]
      %v396 = vld [vmem:[%s1 + $0x28] sm:$0xff]
      %v397 = vld [vmem:[%s1 + $0x30] sm:$0xff]
      %v398 = vld [vmem:[%s1 + $0x38] sm:$0xff]
      %v399 = vld [vmem:[%s1 + $0x40] sm:$0xff]
      %v400 = vld [vmem:[%s1 + $0x48] sm:$0xff]
      %v401 = vld [vmem:[%s1 + $0x50] sm:$0xff]
      %v402 = vld [vmem:[%s1 + $0x58] sm:$0xff]
      %v403 = vld [vmem:[%s1 + $0x60] sm:$0xff]
      %v404 = vld [vmem:[%s1 + $0x68] sm:$0xff]
      %v405 = vld [vmem:[%s1 + $0x70] sm:$0xff]
      %v406 = vld [vmem:[%s1 + $0x78] sm:$0xff]
      %v407 = vld [vmem:[%s1 + $0x80] sm:$0xff]
      %v408 = vld [vmem:[%s1 + $0x88] sm:$0xff]
      %v409 = vld [vmem:[%s1 + $0x90] sm:$0xff]
      %v410 = vld [vmem:[%s1 + $0x98] sm:$0xff]
      %v411 = vld [vmem:[%s1 + $0xa0] sm:$0xff]
      %v412 = vld [vmem:[%s1 + $0xa8] sm:$0xff]
      %v413 = vld [vmem:[%s1 + $0xb0] sm:$0xff]
      %v414 = vld [vmem:[%s1 + $0xb8] sm:$0xff]
      %v415 = vld [vmem:[%s360] sm:$0xff]
      %v416 = vld [vmem:[%s360 + $0x8] sm:$0xff]
      %v417 = vld [vmem:[%s360 + $0x10] sm:$0xff]
      %v418 = vld [vmem:[%s360 + $0x18] sm:$0xff]
      %v419 = vld [vmem:[%s360 + $0x20] sm:$0xff]
      %v420 = vld [vmem:[%s360 + $0x28] sm:$0xff]
      %v421 = vld [vmem:[%s360 + $0x30] sm:$0xff]
      %v422 = vld [vmem:[%s360 + $0x38] sm:$0xff]
      %v423 = vld [vmem:[%s360 + $0x40] sm:$0xff]
      %v424 = vld [vmem:[%s360 + $0x48] sm:$0xff]
      %v425 = vld [vmem:[%s360 + $0x50] sm:$0xff]
      %v426 = vld [vmem:[%s360 + $0x58] sm:$0xff]
      %v427 = vld [vmem:[%s360 + $0x60] sm:$0xff]
      %v428 = vld [vmem:[%s360 + $0x68] sm:$0xff]
      %v429 = vld [vmem:[%s360 + $0x70] sm:$0xff]
      %v430 = vld [vmem:[%s360 + $0x78] sm:$0xff]
      %v431 = vld [vmem:[%s360 + $0x80] sm:$0xff]
      %v432 = vld [vmem:[%s360 + $0x88] sm:$0xff]
      %v433 = vld [vmem:[%s360 + $0x90] sm:$0xff]
      %v434 = vld [vmem:[%s360 + $0x98] sm:$0xff]
      %v435 = vld [vmem:[%s360 + $0xa0] sm:$0xff]
      %v436 = vld [vmem:[%s360 + $0xa8] sm:$0xff]
      %v437 = vld [vmem:[%s360 + $0xb0] sm:$0xff]
      %v438 = vld [vmem:[%s360 + $0xb8] sm:$0xff]
      %v439 = vld [vmem:[%s360 + $0xc0] sm:$0xff]
      %v440 = vld [vmem:[%s360 + $0xc8] sm:$0xff]
      %v441 = vld [vmem:[%s360 + $0xd0] sm:$0xff]
      %v442 = vld [vmem:[%s360 + $0xd8] sm:$0xff]
      %v443 = vld [vmem:[%s360 + $0xe0] sm:$0xff]
      %v444 = vld [vmem:[%s360 + $0xe8] sm:$0xff]
      %v445 = vld [vmem:[%s360 + $0xf0] sm:$0xff]
      %v446 = vld [vmem:[%s360 + $0xf8] sm:$0xff]
      %v447 = vld [vmem:[%s360 + $0x100] sm:$0xff]
      %v448 = vld [vmem:[%s360 + $0x108] sm:$0xff]
      %v449 = vld [vmem:[%s360 + $0x110] sm:$0xff]
      %v450 = vld [vmem:[%s360 + $0x118] sm:$0xff]
      %v451 = vld [vmem:[%s360 + $0x120] sm:$0xff]
      %v452 = vld [vmem:[%s360 + $0x128] sm:$0xff]
      %v453 = vld [vmem:[%s360 + $0x130] sm:$0xff]
      %v454 = vld [vmem:[%s360 + $0x138] sm:$0xff]
      %v455 = vld [vmem:[%s360 + $0x140] sm:$0xff]
      %v456 = vld [vmem:[%s360 + $0x148] sm:$0xff]
      %v457 = vld [vmem:[%s360 + $0x150] sm:$0xff]
      %v458 = vld [vmem:[%s360 + $0x158] sm:$0xff]
      %v459 = vld [vmem:[%s360 + $0x160] sm:$0xff]
      %v460 = vld [vmem:[%s360 + $0x168] sm:$0xff]
      %v461 = vld [vmem:[%s360 + $0x170] sm:$0xff]
      %v462 = vld [vmem:[%s360 + $0x178] sm:$0xff]
      %v463 = vld [vmem:[%s360 + $0x180] sm:$0xff]
      %v464 = vld [vmem:[%s360 + $0x188] sm:$0xff]
      %v465 = vld [vmem:[%s360 + $0x190] sm:$0xff]
      %v466 = vld [vmem:[%s360 + $0x198] sm:$0xff]
      %v467 = vld [vmem:[%s360 + $0x1a0] sm:$0xff]
      %v468 = vld [vmem:[%s360 + $0x1a8] sm:$0xff]
      %v469 = vld [vmem:[%s360 + $0x1b0] sm:$0xff]
      %v470 = vld [vmem:[%s360 + $0x1b8] sm:$0xff]
      %v471 = vld [vmem:[%s360 + $0x1c0] sm:$0xff]
      %v472 = vld [vmem:[%s360 + $0x1c8] sm:$0xff]
      %v473 = vld [vmem:[%s360 + $0x1d0] sm:$0xff]
      %v474 = vld [vmem:[%s360 + $0x1d8] sm:$0xff]
      %v475 = vld [vmem:[%s360 + $0x1e0] sm:$0xff]
      %v476 = vld [vmem:[%s360 + $0x1e8] sm:$0xff]
      %v477 = vld [vmem:[%s360 + $0x1f0] sm:$0xff]
      %v478 = vld [vmem:[%s360 + $0x1f8] sm:$0xff]
      %v479 = vld [vmem:[%s360 + $0x200] sm:$0xff]
      %v480 = vld [vmem:[%s360 + $0x208] sm:$0xff]
      %v481 = vld [vmem:[%s360 + $0x210] sm:$0xff]
      %v482 = vld [vmem:[%s360 + $0x218] sm:$0xff]
      %v483 = vld [vmem:[%s360 + $0x220] sm:$0xff]
      %v484 = vld [vmem:[%s360 + $0x228] sm:$0xff]
      %v485 = vld [vmem:[%s360 + $0x230] sm:$0xff]
      %v486 = vld [vmem:[%s360 + $0x238] sm:$0xff]
      %v487 = vld [vmem:[%s360 + $0x240] sm:$0xff]
      %v488 = vld [vmem:[%s360 + $0x248] sm:$0xff]
      %v489 = vld [vmem:[%s360 + $0x250] sm:$0xff]
      %v490 = vld [vmem:[%s360 + $0x258] sm:$0xff]
      %v491 = vld [vmem:[%s360 + $0x260] sm:$0xff]
      %v492 = vld [vmem:[%s360 + $0x268] sm:$0xff]
      %v493 = vld [vmem:[%s360 + $0x270] sm:$0xff]
      %v494 = vld [vmem:[%s360 + $0x278] sm:$0xff]
      %v495 = vld [vmem:[%s360 + $0x280] sm:$0xff]
      %v496 = vld [vmem:[%s360 + $0x288] sm:$0xff]
      %v497 = vld [vmem:[%s360 + $0x290] sm:$0xff]
      %v498 = vld [vmem:[%s360 + $0x298] sm:$0xff]
      %v499 = vld [vmem:[%s360 + $0x2a0] sm:$0xff]
      %v500 = vld [vmem:[%s360 + $0x2a8] sm:$0xff]
      %v501 = vld [vmem:[%s360 + $0x2b0] sm:$0xff]
      %v502 = vld [vmem:[%s360 + $0x2b8] sm:$0xff]
      %v503 = vld [vmem:[%s360 + $0x2c0] sm:$0xff]
      %v504 = vld [vmem:[%s360 + $0x2c8] sm:$0xff]
      %v505 = vld [vmem:[%s360 + $0x2d0] sm:$0xff]
      %v506 = vld [vmem:[%s360 + $0x2d8] sm:$0xff]
      %v507 = vld [vmem:[%s360 + $0x2e0] sm:$0xff]
      %v508 = vld [vmem:[%s360 + $0x2e8] sm:$0xff]
      %v509 = vld [vmem:[%s360 + $0x2f0] sm:$0xff]
      %v510 = vld [vmem:[%s360 + $0x2f8] sm:$0xff]
      %511 = vmatpush.msra.mxu0 %v445
      %512 = vmatpush.msra.mxu0 %v443
      %513 = vmatpush.msra.mxu0 %v441
      %514 = vmatpush.msra.mxu0 %v439
      %515 = vmatpush.msra.mxu0 %v437
      %516 = vmatpush.msra.mxu0 %v435
      %517 = vmatpush.msra.mxu0 %v433
      %518 = vmatpush.msra.mxu0 %v431
      %519 = vmatpush.msra.mxu0 %v429
      %520 = vmatpush.msra.mxu0 %v427
      %521 = vmatpush.msra.mxu0 %v425
      %522 = vmatpush.msra.mxu0 %v423
      %523 = vmatpush.msra.mxu0 %v421
      %524 = vmatpush.msra.mxu0 %v419
      %525 = vmatpush.msra.mxu0 %v417
      %526 = vmatpush.msra.mxu0 %v415
      %527 = vmatmul.f32.gmra.mxu0 %v391
      %v528 = vpop.f32.mrf.mxu0
      %v529 = vadd.f32 0.0, %v528
      %530 = vmatmul.f32.gmra.mxu0 %v394
      %v531 = vpop.f32.mrf.mxu0
      %v532 = vadd.f32 0.0, %v531
      %533 = vmatmul.f32.gmra.mxu0 %v397
      %v534 = vpop.f32.mrf.mxu0
      %v535 = vadd.f32 0.0, %v534
      %536 = vmatmul.f32.gmra.mxu0 %v400
      %v537 = vpop.f32.mrf.mxu0
      %v538 = vadd.f32 0.0, %v537
      %539 = vmatmul.f32.gmra.mxu0 %v403
      %v540 = vpop.f32.mrf.mxu0
      %v541 = vadd.f32 0.0, %v540
      %542 = vmatmul.f32.gmra.mxu0 %v406
      %v543 = vpop.f32.mrf.mxu0
      %v544 = vadd.f32 0.0, %v543
      %545 = vmatmul.f32.gmra.mxu0 %v409
      %v546 = vpop.f32.mrf.mxu0
      %v547 = vadd.f32 0.0, %v546
      %548 = vmatmul.f32.gmra.mxu0 %v412
      %v549 = vpop.f32.mrf.mxu0
      %v550 = vadd.f32 0.0, %v549
      %551 = vdwg.mxu0
      %552 = vmatpush.msra.mxu0 %v477
      %553 = vmatpush.msra.mxu0 %v475
      %554 = vmatpush.msra.mxu0 %v473
      %555 = vmatpush.msra.mxu0 %v471
      %556 = vmatpush.msra.mxu0 %v469
      %557 = vmatpush.msra.mxu0 %v467
      %558 = vmatpush.msra.mxu0 %v465
      %559 = vmatpush.msra.mxu0 %v463
      %560 = vmatpush.msra.mxu0 %v461
      %561 = vmatpush.msra.mxu0 %v459
      %562 = vmatpush.msra.mxu0 %v457
      %563 = vmatpush.msra.mxu0 %v455
      %564 = vmatpush.msra.mxu0 %v453
      %565 = vmatpush.msra.mxu0 %v451
      %566 = vmatpush.msra.mxu0 %v449
      %567 = vmatpush.msra.mxu0 %v447
      %568 = vmatmul.f32.gmra.mxu0 %v392
      %v569 = vpop.f32.mrf.mxu0
      %v570 = vadd.f32 %v529, %v569
      %571 = vmatmul.f32.gmra.mxu0 %v395
      %v572 = vpop.f32.mrf.mxu0
      %v573 = vadd.f32 %v532, %v572
      %574 = vmatmul.f32.gmra.mxu0 %v398
      %v575 = vpop.f32.mrf.mxu0
      %v576 = vadd.f32 %v535, %v575
      %577 = vmatmul.f32.gmra.mxu0 %v401
      %v578 = vpop.f32.mrf.mxu0
      %v579 = vadd.f32 %v538, %v578
      %580 = vmatmul.f32.gmra.mxu0 %v404
      %v581 = vpop.f32.mrf.mxu0
      %v582 = vadd.f32 %v541, %v581
      %583 = vmatmul.f32.gmra.mxu0 %v407
      %v584 = vpop.f32.mrf.mxu0
      %v585 = vadd.f32 %v544, %v584
      %586 = vmatmul.f32.gmra.mxu0 %v410
      %v587 = vpop.f32.mrf.mxu0
      %v588 = vadd.f32 %v547, %v587
      %589 = vmatmul.f32.gmra.mxu0 %v413
      %v590 = vpop.f32.mrf.mxu0
      %v591 = vadd.f32 %v550, %v590
      %592 = vdwg.mxu0
      %593 = vmatpush.msra.mxu0 %v509
      %594 = vmatpush.msra.mxu0 %v507
      %595 = vmatpush.msra.mxu0 %v505
      %596 = vmatpush.msra.mxu0 %v503
      %597 = vmatpush.msra.mxu0 %v501
      %598 = vmatpush.msra.mxu0 %v499
      %599 = vmatpush.msra.mxu0 %v497
      %600 = vmatpush.msra.mxu0 %v495
      %601 = vmatpush.msra.mxu0 %v493
      %602 = vmatpush.msra.mxu0 %v491
      %603 = vmatpush.msra.mxu0 %v489
      %604 = vmatpush.msra.mxu0 %v487
      %605 = vmatpush.msra.mxu0 %v485
      %606 = vmatpush.msra.mxu0 %v483
      %607 = vmatpush.msra.mxu0 %v481
      %608 = vmatpush.msra.mxu0 %v479
      %609 = vmatmul.f32.gmra.mxu0 %v393
      %v610 = vpop.f32.mrf.mxu0
      %v611 = vadd.f32 %v570, %v610
      %612 = vmatmul.f32.gmra.mxu0 %v396
      %v613 = vpop.f32.mrf.mxu0
      %v614 = vadd.f32 %v573, %v613
      %615 = vmatmul.f32.gmra.mxu0 %v399
      %v616 = vpop.f32.mrf.mxu0
      %v617 = vadd.f32 %v576, %v616
      %618 = vmatmul.f32.gmra.mxu0 %v402
      %v619 = vpop.f32.mrf.mxu0
      %v620 = vadd.f32 %v579, %v619
      %621 = vmatmul.f32.gmra.mxu0 %v405
      %v622 = vpop.f32.mrf.mxu0
      %v623 = vadd.f32 %v582, %v622
      %624 = vmatmul.f32.gmra.mxu0 %v408
      %v625 = vpop.f32.mrf.mxu0
      %v626 = vadd.f32 %v585, %v625
      %627 = vmatmul.f32.gmra.mxu0 %v411
      %v628 = vpop.f32.mrf.mxu0
      %v629 = vadd.f32 %v588, %v628
      %630 = vmatmul.f32.gmra.mxu0 %v414
      %v631 = vpop.f32.mrf.mxu0
      %v632 = vadd.f32 %v591, %v631
      %633 = vdwg.mxu0
      %634 = vmatpush.msra.mxu0 %v446
      %635 = vmatpush.msra.mxu0 %v444
      %636 = vmatpush.msra.mxu0 %v442
      %637 = vmatpush.msra.mxu0 %v440
      %638 = vmatpush.msra.mxu0 %v438
      %639 = vmatpush.msra.mxu0 %v436
      %640 = vmatpush.msra.mxu0 %v434
      %641 = vmatpush.msra.mxu0 %v432
      %642 = vmatpush.msra.mxu0 %v430
      %643 = vmatpush.msra.mxu0 %v428
      %644 = vmatpush.msra.mxu0 %v426
      %645 = vmatpush.msra.mxu0 %v424
      %646 = vmatpush.msra.mxu0 %v422
      %647 = vmatpush.msra.mxu0 %v420
      %648 = vmatpush.msra.mxu0 %v418
      %649 = vmatpush.msra.mxu0 %v416
      %650 = vmatmul.f32.gmra.mxu0 %v391
      %v651 = vpop.f32.mrf.mxu0
      %v652 = vadd.f32 0.0, %v651
      %653 = vmatmul.f32.gmra.mxu0 %v394
      %v654 = vpop.f32.mrf.mxu0
      %v655 = vadd.f32 0.0, %v654
      %656 = vmatmul.f32.gmra.mxu0 %v397
      %v657 = vpop.f32.mrf.mxu0
      %v658 = vadd.f32 0.0, %v657
      %659 = vmatmul.f32.gmra.mxu0 %v400
      %v660 = vpop.f32.mrf.mxu0
      %v661 = vadd.f32 0.0, %v660
      %662 = vmatmul.f32.gmra.mxu0 %v403
      %v663 = vpop.f32.mrf.mxu0
      %v664 = vadd.f32 0.0, %v663
      %665 = vmatmul.f32.gmra.mxu0 %v406
      %v666 = vpop.f32.mrf.mxu0
      %v667 = vadd.f32 0.0, %v666
      %668 = vmatmul.f32.gmra.mxu0 %v409
      %v669 = vpop.f32.mrf.mxu0
      %v670 = vadd.f32 0.0, %v669
      %671 = vmatmul.f32.gmra.mxu0 %v412
      %v672 = vpop.f32.mrf.mxu0
      %v673 = vadd.f32 0.0, %v672
      %674 = vdwg.mxu0
      %675 = vmatpush.msra.mxu0 %v478
      %676 = vmatpush.msra.mxu0 %v476
      %677 = vmatpush.msra.mxu0 %v474
      %678 = vmatpush.msra.mxu0 %v472
      %679 = vmatpush.msra.mxu0 %v470
      %680 = vmatpush.msra.mxu0 %v468
      %681 = vmatpush.msra.mxu0 %v466
      %682 = vmatpush.msra.mxu0 %v464
      %683 = vmatpush.msra.mxu0 %v462
      %684 = vmatpush.msra.mxu0 %v460
      %685 = vmatpush.msra.mxu0 %v458
      %686 = vmatpush.msra.mxu0 %v456
      %687 = vmatpush.msra.mxu0 %v454
      %688 = vmatpush.msra.mxu0 %v452
      %689 = vmatpush.msra.mxu0 %v450
      %690 = vmatpush.msra.mxu0 %v448
      %691 = vmatmul.f32.gmra.mxu0 %v392
      %v692 = vpop.f32.mrf.mxu0
      %v693 = vadd.f32 %v652, %v692
      %694 = vmatmul.f32.gmra.mxu0 %v395
      %v695 = vpop.f32.mrf.mxu0
      %v696 = vadd.f32 %v655, %v695
      %697 = vmatmul.f32.gmra.mxu0 %v398
      %v698 = vpop.f32.mrf.mxu0
      %v699 = vadd.f32 %v658, %v698
      %700 = vmatmul.f32.gmra.mxu0 %v401
      %v701 = vpop.f32.mrf.mxu0
      %v702 = vadd.f32 %v661, %v701
      %703 = vmatmul.f32.gmra.mxu0 %v404
      %v704 = vpop.f32.mrf.mxu0
      %v705 = vadd.f32 %v664, %v704
      %706 = vmatmul.f32.gmra.mxu0 %v407
      %v707 = vpop.f32.mrf.mxu0
      %v708 = vadd.f32 %v667, %v707
      %709 = vmatmul.f32.gmra.mxu0 %v410
      %v710 = vpop.f32.mrf.mxu0
      %v711 = vadd.f32 %v670, %v710
      %712 = vmatmul.f32.gmra.mxu0 %v413
      %v713 = vpop.f32.mrf.mxu0
      %v714 = vadd.f32 %v673, %v713
      %715 = vdwg.mxu0
      %716 = vmatpush.msra.mxu0 %v510
      %717 = vmatpush.msra.mxu0 %v508
      %718 = vmatpush.msra.mxu0 %v506
      %719 = vmatpush.msra.mxu0 %v504
      %720 = vmatpush.msra.mxu0 %v502
      %721 = vmatpush.msra.mxu0 %v500
      %722 = vmatpush.msra.mxu0 %v498
      %723 = vmatpush.msra.mxu0 %v496
      %724 = vmatpush.msra.mxu0 %v494
      %725 = vmatpush.msra.mxu0 %v492
      %726 = vmatpush.msra.mxu0 %v490
      %727 = vmatpush.msra.mxu0 %v488
      %728 = vmatpush.msra.mxu0 %v486
      %729 = vmatpush.msra.mxu0 %v484
      %730 = vmatpush.msra.mxu0 %v482
      %731 = vmatpush.msra.mxu0 %v480
      %732 = vmatmul.f32.gmra.mxu0 %v393
      %v733 = vpop.f32.mrf.mxu0
      %v734 = vadd.f32 %v693, %v733
      %735 = vmatmul.f32.gmra.mxu0 %v396
      %v736 = vpop.f32.mrf.mxu0
      %v737 = vadd.f32 %v696, %v736
      %738 = vmatmul.f32.gmra.mxu0 %v399
      %v739 = vpop.f32.mrf.mxu0
      %v740 = vadd.f32 %v699, %v739
      %741 = vmatmul.f32.gmra.mxu0 %v402
      %v742 = vpop.f32.mrf.mxu0
      %v743 = vadd.f32 %v702, %v742
      %744 = vmatmul.f32.gmra.mxu0 %v405
      %v745 = vpop.f32.mrf.mxu0
      %v746 = vadd.f32 %v705, %v745
      %747 = vmatmul.f32.gmra.mxu0 %v408
      %v748 = vpop.f32.mrf.mxu0
      %v749 = vadd.f32 %v708, %v748
      %750 = vmatmul.f32.gmra.mxu0 %v411
      %v751 = vpop.f32.mrf.mxu0
      %v752 = vadd.f32 %v711, %v751
      %753 = vmatmul.f32.gmra.mxu0 %v414
      %v754 = vpop.f32.mrf.mxu0
      %v755 = vadd.f32 %v714, %v754
      %756 = vdwg.mxu0
      %v757 = vld [vmem:[%s5] sm:$0xff]
      %v758 = vld [vmem:[%s5 + $0x8] sm:$0xff]
      %v759 = vld [vmem:[%s5 + $0x10] sm:$0xff]
      %v760 = vld [vmem:[%s5 + $0x18] sm:$0xff]
      %s761 = scalar_lea.vmem %s5, 32
      %v762 = vld [vmem:[%s761] sm:$0xff]
      %v763 = vld [vmem:[%s761 + $0x8] sm:$0xff]
      %v764 = vld [vmem:[%s761 + $0x10] sm:$0xff]
      %v765 = vld [vmem:[%s761 + $0x18] sm:$0xff]
      %s766 = scalar_lea.vmem %s5, 64
      %v767 = vld [vmem:[%s766] sm:$0xff]
      %v768 = vld [vmem:[%s766 + $0x8] sm:$0xff]
      %v769 = vld [vmem:[%s766 + $0x10] sm:$0xff]
      %v770 = vld [vmem:[%s766 + $0x18] sm:$0xff]
      %s771 = scalar_lea.vmem %s5, 96
      %v772 = vld [vmem:[%s771] sm:$0xff]
      %v773 = vld [vmem:[%s771 + $0x8] sm:$0xff]
      %v774 = vld [vmem:[%s771 + $0x10] sm:$0xff]
      %v775 = vld [vmem:[%s771 + $0x18] sm:$0xff]
      %v776 = vld [vmem:[%s365] sm:$0xff]
      %v777 = vld [vmem:[%s365 + $0x8] sm:$0xff]
      %v778 = vld [vmem:[%s365 + $0x10] sm:$0xff]
      %v779 = vld [vmem:[%s365 + $0x18] sm:$0xff]
      %v780 = vld [vmem:[%s365 + $0x20] sm:$0xff]
      %v781 = vld [vmem:[%s365 + $0x28] sm:$0xff]
      %v782 = vld [vmem:[%s365 + $0x30] sm:$0xff]
      %v783 = vld [vmem:[%s365 + $0x38] sm:$0xff]
      %v784 = vld [vmem:[%s370] sm:$0xff]
      %v785 = vld [vmem:[%s370 + $0x8] sm:$0xff]
      %v786 = vld [vmem:[%s370 + $0x10] sm:$0xff]
      %v787 = vld [vmem:[%s370 + $0x18] sm:$0xff]
      %v788 = vld [vmem:[%s370 + $0x20] sm:$0xff]
      %v789 = vld [vmem:[%s370 + $0x28] sm:$0xff]
      %v790 = vld [vmem:[%s370 + $0x30] sm:$0xff]
      %v791 = vld [vmem:[%s370 + $0x38] sm:$0xff]
      %v792 = vld [vmem:[%s375] sm:$0xff]
      %v793 = vld [vmem:[%s375 + $0x8] sm:$0xff]
      %v794 = vld [vmem:[%s375 + $0x10] sm:$0xff]
      %v795 = vld [vmem:[%s375 + $0x18] sm:$0xff]
      %v796 = vld [vmem:[%s375 + $0x20] sm:$0xff]
      %v797 = vld [vmem:[%s375 + $0x28] sm:$0xff]
      %v798 = vld [vmem:[%s375 + $0x30] sm:$0xff]
      %v799 = vld [vmem:[%s375 + $0x38] sm:$0xff]
      %801 = vset.pattern.permute.xlu0 0
      %802 = vperm.xlu0 %801, %v762
      %v803 = vpop.permute.xlu0 %802
      %806 = vset.pattern.permute.xlu0 0
      %807 = vperm.xlu0 %806, %v763
      %v808 = vpop.permute.xlu0 %807
      %811 = vset.pattern.permute.xlu0 0
      %812 = vperm.xlu0 %811, %v764
      %v813 = vpop.permute.xlu0 %812
      %816 = vset.pattern.permute.xlu0 0
      %817 = vperm.xlu0 %816, %v765
      %v818 = vpop.permute.xlu0 %817
      %v820 = vmul.f32 %v792, %v803
      %v821 = vmul.f32 %v793, %v803
      %v822 = vmul.f32 %v794, %v808
      %v823 = vmul.f32 %v795, %v808
      %v824 = vmul.f32 %v796, %v813
      %v825 = vmul.f32 %v797, %v813
      %v826 = vmul.f32 %v798, %v818
      %v827 = vmul.f32 %v799, %v818
      %v828 = vadd.f32 %v820, %v623
      %v829 = vadd.f32 %v821, %v746
      %v830 = vadd.f32 %v822, %v626
      %v831 = vadd.f32 %v823, %v749
      %v832 = vadd.f32 %v824, %v629
      %v833 = vadd.f32 %v825, %v752
      %v834 = vadd.f32 %v826, %v632
      %v835 = vadd.f32 %v827, %v755
      %837 = vset.pattern.permute.xlu0 0
      %838 = vperm.xlu0 %837, %v772
      %v839 = vpop.permute.xlu0 %838
      %842 = vset.pattern.permute.xlu0 0
      %843 = vperm.xlu0 %842, %v773
      %v844 = vpop.permute.xlu0 %843
      %847 = vset.pattern.permute.xlu0 0
      %848 = vperm.xlu0 %847, %v774
      %v849 = vpop.permute.xlu0 %848
      %852 = vset.pattern.permute.xlu0 0
      %853 = vperm.xlu0 %852, %v775
      %v854 = vpop.permute.xlu0 %853
      %v856 = vmul.f32 %v839, %v828
      %v857 = vmul.f32 %v839, %v829
      %v858 = vmul.f32 %v844, %v830
      %v859 = vmul.f32 %v844, %v831
      %v860 = vmul.f32 %v849, %v832
      %v861 = vmul.f32 %v849, %v833
      %v862 = vmul.f32 %v854, %v834
      %v863 = vmul.f32 %v854, %v835
      %865 = vset.pattern.permute.xlu0 0
      %866 = vperm.xlu0 %865, %v767
      %v867 = vpop.permute.xlu0 %866
      %870 = vset.pattern.permute.xlu0 0
      %871 = vperm.xlu0 %870, %v768
      %v872 = vpop.permute.xlu0 %871
      %875 = vset.pattern.permute.xlu0 0
      %876 = vperm.xlu0 %875, %v769
      %v877 = vpop.permute.xlu0 %876
      %880 = vset.pattern.permute.xlu0 0
      %881 = vperm.xlu0 %880, %v770
      %v882 = vpop.permute.xlu0 %881
      %v884 = vadd.f32 %v867, %v856
      %v885 = vadd.f32 %v867, %v857
      %v886 = vadd.f32 %v872, %v858
      %v887 = vadd.f32 %v872, %v859
      %v888 = vadd.f32 %v877, %v860
      %v889 = vadd.f32 %v877, %v861
      %v890 = vadd.f32 %v882, %v862
      %v891 = vadd.f32 %v882, %v863
      %893 = vset.pattern.permute.xlu0 0
      %894 = vperm.xlu0 %893, %v757
      %v895 = vpop.permute.xlu0 %894
      %898 = vset.pattern.permute.xlu0 0
      %899 = vperm.xlu0 %898, %v758
      %v900 = vpop.permute.xlu0 %899
      %903 = vset.pattern.permute.xlu0 0
      %904 = vperm.xlu0 %903, %v759
      %v905 = vpop.permute.xlu0 %904
      %908 = vset.pattern.permute.xlu0 0
      %909 = vperm.xlu0 %908, %v760
      %v910 = vpop.permute.xlu0 %909
      %v912 = vmul.f32 %v776, %v895
      %v913 = vmul.f32 %v777, %v895
      %v914 = vmul.f32 %v778, %v900
      %v915 = vmul.f32 %v779, %v900
      %v916 = vmul.f32 %v780, %v905
      %v917 = vmul.f32 %v781, %v905
      %v918 = vmul.f32 %v782, %v910
      %v919 = vmul.f32 %v783, %v910
      %v920 = vadd.f32 %v912, %v611
      %v921 = vadd.f32 %v913, %v734
      %v922 = vadd.f32 %v914, %v614
      %v923 = vadd.f32 %v915, %v737
      %v924 = vadd.f32 %v916, %v617
      %v925 = vadd.f32 %v917, %v740
      %v926 = vadd.f32 %v918, %v620
      %v927 = vadd.f32 %v919, %v743
      %v928 = vmul.f32 %v839, %v792
      %v929 = vmul.f32 %v839, %v793
      %v930 = vmul.f32 %v844, %v794
      %v931 = vmul.f32 %v844, %v795
      %v932 = vmul.f32 %v849, %v796
      %v933 = vmul.f32 %v849, %v797
      %v934 = vmul.f32 %v854, %v798
      %v935 = vmul.f32 %v854, %v799
      %v936 = vadd.f32 %v867, %v928
      %v937 = vadd.f32 %v867, %v929
      %v938 = vadd.f32 %v872, %v930
      %v939 = vadd.f32 %v872, %v931
      %v940 = vadd.f32 %v877, %v932
      %v941 = vadd.f32 %v877, %v933
      %v942 = vadd.f32 %v882, %v934
      %v943 = vadd.f32 %v882, %v935
      %v944 = vmul.f32 %v784, %v936
      %v945 = vmul.f32 %v785, %v937
      %v946 = vmul.f32 %v786, %v938
      %v947 = vmul.f32 %v787, %v939
      %v948 = vmul.f32 %v788, %v940
      %v949 = vmul.f32 %v789, %v941
      %v950 = vmul.f32 %v790, %v942
      %v951 = vmul.f32 %v791, %v943
      %v952 = vsub.f32 %v920, %v944
      %v953 = vsub.f32 %v921, %v945
      %v954 = vsub.f32 %v922, %v946
      %v955 = vsub.f32 %v923, %v947
      %v956 = vsub.f32 %v924, %v948
      %v957 = vsub.f32 %v925, %v949
      %v958 = vsub.f32 %v926, %v950
      %v959 = vsub.f32 %v927, %v951
      %vm960 = vcmp.gt.f32.partialorder %v952, %v884
      %vm961 = vcmp.gt.f32.partialorder %v953, %v885
      %vm962 = vcmp.gt.f32.partialorder %v954, %v886
      %vm963 = vcmp.gt.f32.partialorder %v955, %v887
      %vm964 = vcmp.gt.f32.partialorder %v956, %v888
      %vm965 = vcmp.gt.f32.partialorder %v957, %v889
      %vm966 = vcmp.gt.f32.partialorder %v958, %v890
      %vm967 = vcmp.gt.f32.partialorder %v959, %v891
      %v968 = vsel %vm960, 1, 0
      %v969 = vsel %vm961, 1, 0
      %v970 = vsel %vm962, 1, 0
      %v971 = vsel %vm963, 1, 0
      %v972 = vsel %vm964, 1, 0
      %v973 = vsel %vm965, 1, 0
      %v974 = vsel %vm966, 1, 0
      %v975 = vsel %vm967, 1, 0
      %v976 = vcvt.s32.f32 %v968
      %v977 = vcvt.s32.f32 %v969
      %v978 = vcvt.s32.f32 %v970
      %v979 = vcvt.s32.f32 %v971
      %v980 = vcvt.s32.f32 %v972
      %v981 = vcvt.s32.f32 %v973
      %v982 = vcvt.s32.f32 %v974
      %v983 = vcvt.s32.f32 %v975
      %984 = vst [vmem:[%s380] sm:$0xff] %v952
      %985 = vst [vmem:[%s380 + $0x8] sm:$0xff] %v953
      %986 = vst [vmem:[%s380 + $0x10] sm:$0xff] %v954
      %987 = vst [vmem:[%s380 + $0x18] sm:$0xff] %v955
      %988 = vst [vmem:[%s380 + $0x20] sm:$0xff] %v956
      %989 = vst [vmem:[%s380 + $0x28] sm:$0xff] %v957
      %990 = vst [vmem:[%s380 + $0x30] sm:$0xff] %v958
      %991 = vst [vmem:[%s380 + $0x38] sm:$0xff] %v959
      %992 = vst [vmem:[%s385] sm:$0xff] %v976
      %993 = vst [vmem:[%s385 + $0x8] sm:$0xff] %v977
      %994 = vst [vmem:[%s385 + $0x10] sm:$0xff] %v978
      %995 = vst [vmem:[%s385 + $0x18] sm:$0xff] %v979
      %996 = vst [vmem:[%s385 + $0x20] sm:$0xff] %v980
      %997 = vst [vmem:[%s385 + $0x28] sm:$0xff] %v981
      %998 = vst [vmem:[%s385 + $0x30] sm:$0xff] %v982
      %999 = vst [vmem:[%s385 + $0x38] sm:$0xff] %v983
      %1000 = vst [vmem:[%s390] sm:$0xff] %v828
      %1001 = vst [vmem:[%s390 + $0x8] sm:$0xff] %v829
      %1002 = vst [vmem:[%s390 + $0x10] sm:$0xff] %v830
      %1003 = vst [vmem:[%s390 + $0x18] sm:$0xff] %v831
      %1004 = vst [vmem:[%s390 + $0x20] sm:$0xff] %v832
      %1005 = vst [vmem:[%s390 + $0x28] sm:$0xff] %v833
      %1006 = vst [vmem:[%s390 + $0x30] sm:$0xff] %v834
      %1007 = vst [vmem:[%s390 + $0x38] sm:$0xff] %v835
      %p1008 = scmp.lt.s32.totalorder %s20, 1
      %s1009 = scalar_select %p1008, %s20, 1
      %s1010 = smul.addr %s1009, 8
      %s1011 = smul.addr %s1010, 8
      %s1012 = scalar_lea.vmem %s6, %s1011
      %p1013 = scmp.lt.s32.totalorder %s20, 1
      %s1014 = scalar_select %p1013, %s20, 1
      %s1015 = smul.addr %s1014, 8
      %s1016 = smul.addr %s1015, 8
      %s1017 = scalar_lea.vmem %s7, %s1016
      %p1018 = scmp.lt.s32.totalorder %s20, 1
      %s1019 = scalar_select %p1018, %s20, 1
      %s1020 = smul.addr %s1019, 8
      %s1021 = smul.addr %s1020, 8
      %s1022 = scalar_lea.vmem %s8, %s1021
      // Predicated region
      $region45: #{conv_xlif_recurrent.1} parent=43 // pred_check
        %p1023 = pneg %p184
      $region46: #{conv_xlif_recurrent.1} parent=43 // pred_check_branch
        %1025 = sbr.rel (%p1023) target = $region48
      $region47: #{conv_xlif_recurrent.1} parent=43 // pred_region
        _
      $region48: #{conv_xlif_recurrent.1} parent=43 // pred_fallthru
        _
      // Predicated region
      $region49: #{conv_xlif_recurrent.1} parent=43 // pred_check
        %p1026 = pneg %p210
      $region50: #{conv_xlif_recurrent.1} parent=43 // pred_check_branch
        %1028 = sbr.rel (%p1026) target = $region52
      $region51: #{conv_xlif_recurrent.1} parent=43 // pred_region
        _
      $region52: #{conv_xlif_recurrent.1} parent=43 // pred_fallthru
        _
      // Predicated region
      $region53: #{conv_xlif_recurrent.1} parent=43 // pred_check
        %p1029 = pneg %p236
      $region54: #{conv_xlif_recurrent.1} parent=43 // pred_check_branch
        %1031 = sbr.rel (%p1029) target = $region56
      $region55: #{conv_xlif_recurrent.1} parent=43 // pred_region
        _
      $region56: #{conv_xlif_recurrent.1} parent=43 // pred_fallthru
        _
    $region44: #{conv_xlif_recurrent.1} parent=5 // pred_fallthru
      _
    %p1032 = scmp.le.s32.totalorder 2, %s15
    // Predicated region
    $region57: #{conv_xlif_recurrent.1} parent=5 // pred_check
      %p1033 = pneg %p1032
    $region58: #{conv_xlif_recurrent.1} parent=5 // pred_check_branch
      %1035 = sbr.rel (%p1033) target = $region60
    $region59: #{conv_xlif_recurrent.1} parent=5 // pred_region
      %s1036 = ssub.s32 %s15, 2
      // Predicated region
      $region61: #{conv_xlif_recurrent.1} parent=59 // pred_check
        %p1037 = pneg %p190
      $region62: #{conv_xlif_recurrent.1} parent=59 // pred_check_branch
        %1039 = sbr.rel (%p1037) target = $region64
      $region63: #{conv_xlif_recurrent.1} parent=59 // pred_region
        %p1040 = scmp.lt.s32.totalorder %s21, 1
        %s1041 = scalar_select %p1040, %s21, 1
        %s1042 = smul.addr %s1041, 8
        %s1043 = smul.addr %s1042, 8
        %s1044 = scalar_lea.vmem %s6, %s1043
      $region64: #{conv_xlif_recurrent.1} parent=59 // pred_fallthru
        _
      // Predicated region
      $region65: #{conv_xlif_recurrent.1} parent=59 // pred_check
        %p1045 = pneg %p216
      $region66: #{conv_xlif_recurrent.1} parent=59 // pred_check_branch
        %1047 = sbr.rel (%p1045) target = $region68
      $region67: #{conv_xlif_recurrent.1} parent=59 // pred_region
        %p1048 = scmp.lt.s32.totalorder %s21, 1
        %s1049 = scalar_select %p1048, %s21, 1
        %s1050 = smul.addr %s1049, 8
        %s1051 = smul.addr %s1050, 8
        %s1052 = scalar_lea.vmem %s7, %s1051
      $region68: #{conv_xlif_recurrent.1} parent=59 // pred_fallthru
        _
      // Predicated region
      $region69: #{conv_xlif_recurrent.1} parent=59 // pred_check
        %p1053 = pneg %p242
      $region70: #{conv_xlif_recurrent.1} parent=59 // pred_check_branch
        %1055 = sbr.rel (%p1053) target = $region72
      $region71: #{conv_xlif_recurrent.1} parent=59 // pred_region
        %p1056 = scmp.lt.s32.totalorder %s21, 1
        %s1057 = scalar_select %p1056, %s21, 1
        %s1058 = smul.addr %s1057, 8
        %s1059 = smul.addr %s1058, 8
        %s1060 = scalar_lea.vmem %s8, %s1059
      $region72: #{conv_xlif_recurrent.1} parent=59 // pred_fallthru
        _
    $region60: #{conv_xlif_recurrent.1} parent=5 // pred_fallthru
      _
  $region6: #{conv_xlif_recurrent.1} parent=0 // loop_footer
    %s19 = sadd.s32 1, %s15
  $region7: #{conv_xlif_recurrent.1} parent=0 // loop_footer_branch
    %14 = sbr.rel target = $region3
  $region8: #{conv_xlif_recurrent.1} parent=0 // loop_exit
    _

</llo_original>
